<compile_context>
chip_gen: v7x
topology: tpu7x:2x2x1
jax: 0.10.0
libtpu: 0.0.40
codegen_flags: <defaults>
</compile_context>

<pallas_src>
import functools

import jax
import jax.numpy as jnp
from jax.experimental import pallas as pl
from jax.experimental.pallas import tpu as pltpu


# --------------------------------------------------------------------------
# Kernels
# --------------------------------------------------------------------------
def _ca_fused_kernel(x_ref, w1_ref, b1_ref, w2_ref, b2_ref, o_ref):
    """Single-pass path: x block (bt, C, HW) -> out block (bt, C, HW)."""
    x = x_ref[...].astype(jnp.float32)                       # (bt, C, HW)
    avg = jnp.mean(x, axis=-1)                                # (bt, C)
    h = jnp.dot(avg, w1_ref[...], preferred_element_type=jnp.float32) + b1_ref[...]
    h = jnp.maximum(h, 0.0)
    y = jnp.dot(h, w2_ref[...], preferred_element_type=jnp.float32) + b2_ref[...]
    y = jax.nn.sigmoid(y)                                     # (bt, C)
    # Channel-wise rescale, broadcast over the lane-dense HW axis.
    o_ref[...] = (x * y[:, :, None]).astype(o_ref.dtype)


def _ca_pool_kernel(x_ref, avg_ref, *, inv_hw):
    """Fallback pass 1: accumulate per-channel mean over HW tiles."""
    t = pl.program_id(1)
    part = jnp.sum(x_ref[...].astype(jnp.float32), axis=-1)[:, None, :]  # (bt,1,C)

    @pl.when(t == 0)
    def _():
        avg_ref[...] = jnp.zeros_like(avg_ref)

    avg_ref[...] += part

    @pl.when(t == pl.num_programs(1) - 1)
    def _():
        avg_ref[...] = avg_ref[...] * inv_hw


def _ca_rescale_kernel(avg_ref, w1_ref, b1_ref, w2_ref, b2_ref, x_ref, o_ref):
    """Fallback pass 2: recompute tiny squeeze-excite, rescale one HW tile."""
    avg = avg_ref[...][:, 0, :]                               # (bt, C)
    h = jnp.maximum(
        jnp.dot(avg, w1_ref[...], preferred_element_type=jnp.float32) + b1_ref[...],
        0.0)
    y = jax.nn.sigmoid(
        jnp.dot(h, w2_ref[...], preferred_element_type=jnp.float32) + b2_ref[...])
    x = x_ref[...].astype(jnp.float32)                        # (bt, C, thw)
    o_ref[...] = (x * y[:, :, None]).astype(o_ref.dtype)


# --------------------------------------------------------------------------
# Wrapper helpers
# --------------------------------------------------------------------------
def _tile_targets():
    """(target tile bytes, vmem_limit_bytes or None), per TPU generation."""
    try:
        kind = jax.devices()[0].device_kind.lower()
    except Exception:
        kind = ""
    if "v7" in kind or "7x" in kind:
        # 2.2-2.5x HBM BW vs v6e: bigger tiles needed to hide per-step cost;
        # 64 MiB physical VMEM -> raise the 32 MiB scoped default, keep headroom.
        return 8 << 20, 48 << 20
    if "v6" in kind:
        return 4 << 20, 48 << 20
    # v5e / unknown: 2 MiB tiles fit the 16 MiB default scoped VMEM as-is.
    return 2 << 20, None


def _compiler_params(dims, vmem_limit):
    if vmem_limit is None:
        return pltpu.CompilerParams(dimension_semantics=dims)
    return pltpu.CompilerParams(dimension_semantics=dims,
                                vmem_limit_bytes=vmem_limit)


def _largest_hw_tile(hw, max_elems):
    """Largest divisor of hw <= max_elems, preferring lane-dense (x128) tiles."""
    best_128, best_any = None, None
    d = 1
    while d * d <= hw:
        if hw % d == 0:
            for cand in (d, hw // d):
                if cand <= max_elems:
                    if best_any is None or cand > best_any:
                        best_any = cand
                    if cand % 128 == 0 and (best_128 is None or cand > best_128):
                        best_128 = cand
        d += 1
    if best_128 is not None:
        return best_128
    return best_any if best_any is not None else hw


# --------------------------------------------------------------------------
# Public entry point
# --------------------------------------------------------------------------
def ca_layer(x_nchw, w1, b1, w2, b2, *, force_two_pass=False, hw_tile=None):
    """x_nchw: (B, C, H, W). w1: (C, C//8), b1: (C//8,), w2: (C//8, C), b2: (C,)."""
    B, C, H, W = x_nchw.shape
    C8 = w1.shape[1]
    HW = H * W

    # Native layout: NCHW -> (B, C, HW) is a free, contiguous reshape.
    x = x_nchw.reshape(B, C, HW)
    w1 = w1.astype(jnp.float32)
    w2 = w2.astype(jnp.float32)
    b1_2d = b1.reshape(1, C8).astype(jnp.float32)
    b2_2d = b2.reshape(1, C).astype(jnp.float32)

    target_bytes, vmem_limit = _tile_targets()
    itemsize = jnp.dtype(x.dtype).itemsize
    per_image_bytes = C * HW * itemsize

    single_pass = (not force_two_pass) and per_image_bytes <= target_bytes

    if single_pass:
        # ---- traffic-optimal path: one read + one write of x ----
        bt = max(1, target_bytes // per_image_bytes)
        if B >= 2:
            bt = min(bt, max(1, B // 2))   # >=2 grid steps -> both v7x TCs busy
        bt = min(bt, B)
        n_b = pl.cdiv(B, bt)               # ragged last block handled by Pallas

        out = pl.pallas_call(
            _ca_fused_kernel,
            out_shape=jax.ShapeDtypeStruct((B, C, HW), x.dtype),
            grid_spec=pltpu.PrefetchScalarGridSpec(
                num_scalar_prefetch=0,
                grid=(n_b,),
                in_specs=[
                    pl.BlockSpec((bt, C, HW), lambda b: (b, 0, 0)),  # x
                    pl.BlockSpec((C, C8), lambda b: (0, 0)),         # w1
                    pl.BlockSpec((1, C8), lambda b: (0, 0)),         # b1
                    pl.BlockSpec((C8, C), lambda b: (0, 0)),         # w2
                    pl.BlockSpec((1, C), lambda b: (0, 0)),          # b2
                ],
                out_specs=pl.BlockSpec((bt, C, HW), lambda b: (b, 0, 0)),
            ),
            compiler_params=_compiler_params(("parallel",), vmem_limit),
        )(x, w1, b1_2d, w2, b2_2d)
        return out.reshape(B, C, H, W)

    # ---- two-pass HW-tiled fallback (one image doesn't fit the tile budget) ----
    if hw_tile is None:
        max_elems = max(128, target_bytes // (C * itemsize))
        hw_tile = _largest_hw_tile(HW, max_elems)
    assert HW % hw_tile == 0, "hw_tile must divide H*W"
    n_t = HW // hw_tile

    # Pass 1: per-channel mean over HW tiles (accumulator output, hw axis arbitrary).
    avg = pl.pallas_call(
        functools.partial(_ca_pool_kernel, inv_hw=1.0 / float(HW)),
        out_shape=jax.ShapeDtypeStruct((B, 1, C), jnp.float32),
        grid_spec=pltpu.PrefetchScalarGridSpec(
            num_scalar_prefetch=0,
            grid=(B, n_t),
            in_specs=[pl.BlockSpec((1, C, hw_tile), lambda b, t: (b, 0, t))],
            out_specs=pl.BlockSpec((1, 1, C), lambda b, t: (b, 0, 0)),
        ),
        compiler_params=_compiler_params(("parallel", "arbitrary"), vmem_limit),
    )(x)

    # Pass 2: recompute the tiny squeeze-excite per tile (negligible) and rescale.
    out = pl.pallas_call(
        _ca_rescale_kernel,
        out_shape=jax.ShapeDtypeStruct((B, C, HW), x.dtype),
        grid_spec=pltpu.PrefetchScalarGridSpec(
            num_scalar_prefetch=0,
            grid=(B, n_t),
            in_specs=[
                pl.BlockSpec((1, 1, C), lambda b, t: (b, 0, 0)),      # avg
                pl.BlockSpec((C, C8), lambda b, t: (0, 0)),           # w1
                pl.BlockSpec((1, C8), lambda b, t: (0, 0)),           # b1
                pl.BlockSpec((C8, C), lambda b, t: (0, 0)),           # w2
                pl.BlockSpec((1, C), lambda b, t: (0, 0)),            # b2
                pl.BlockSpec((1, C, hw_tile), lambda b, t: (b, 0, t)),  # x tile
            ],
            out_specs=pl.BlockSpec((1, C, hw_tile), lambda b, t: (b, 0, t)),
        ),
        compiler_params=_compiler_params(("parallel", "parallel"), vmem_limit),
    )(avg, w1, b1_2d, w2, b2_2d, x)

    return out.reshape(B, C, H, W)


# --------------------------------------------------------------------------
# Reference + harness
# --------------------------------------------------------------------------
def _reference(x_nchw, w1, b1, w2, b2):
    avg = jnp.mean(x_nchw, axis=(2, 3))                      # (B, C)
    h = jnp.maximum(avg @ w1 + b1, 0.0)                      # (B, C//8)
    y = jax.nn.sigmoid(h @ w2 + b2)                          # (B, C)
    return x_nchw * y[:, :, None, None]


if __name__ == "__main__":
    # CALayer(64) as used inside FAGCANet / its residual blocks.
    B, C, H, W = 2, 64, 16, 16
    C8 = C // 8

    key = jax.random.PRNGKey(0)
    kx, k1, k2, k3, k4 = jax.random.split(key, 5)

    x = jax.random.normal(kx, (B, C, H, W), dtype=jnp.float32)
    # Conv2d 1x1 weights reshaped to matmul form:
    # conv1 weight (C//8, C, 1, 1) -> (C, C//8); conv2 weight (C, C//8, 1, 1) -> (C//8, C)
    w1 = jax.random.normal(k1, (C, C8), dtype=jnp.float32) * 0.1
    b1 = jax.random.normal(k2, (C8,), dtype=jnp.float32) * 0.1
    w2 = jax.random.normal(k3, (C8, C), dtype=jnp.float32) * 0.1
    b2 = jax.random.normal(k4, (C,), dtype=jnp.float32) * 0.1

    ref = _reference(x, w1, b1, w2, b2)

    # 1) Single-pass (fused) path — the default for images that fit VMEM.
    out = jax.block_until_ready(ca_layer(x, w1, b1, w2, b2))
    assert out.shape == (B, C, H, W)
    assert jnp.allclose(out, ref, atol=1e-5, rtol=1e-5), "fused path mismatch"

    # 2) Two-pass HW-tiled fallback — forced at the small shape to exercise it.
    out2 = jax.block_until_ready(
        ca_layer(x, w1, b1, w2, b2, force_two_pass=True, hw_tile=128))
    assert jnp.allclose(out2, ref, atol=1e-5, rtol=1e-5), "two-pass path mismatch"

    # 3) bf16-I/O variant (halves HBM traffic on v6e/v7x; math stays f32 inside).
    out_bf16 = jax.block_until_ready(
        ca_layer(x.astype(jnp.bfloat16), w1, b1, w2, b2))
    assert out_bf16.dtype == jnp.bfloat16
    assert jnp.allclose(out_bf16.astype(jnp.float32), ref, atol=5e-2, rtol=5e-2), \
        "bf16 path mismatch"

    print("KERNEL_OK")
</pallas_src>

<mosaic_0001>
module attributes {stable_mosaic.version = 11 : i64} {
  func.func @_ca_fused_kernel(%arg0: i32, %arg1: memref<1x64x256xf32, #tpu.memory_space<vmem>>, %arg2: memref<64x8xf32, #tpu.memory_space<vmem>>, %arg3: memref<1x8xf32, #tpu.memory_space<vmem>>, %arg4: memref<8x64xf32, #tpu.memory_space<vmem>>, %arg5: memref<1x64xf32, #tpu.memory_space<vmem>>, %arg6: memref<1x64x256xf32, #tpu.memory_space<vmem>>) attributes {dimension_semantics = [#tpu.dimension_semantics<parallel>], iteration_bounds = array<i64: 2>, scalar_prefetch = 0 : i64, scratch_operands = 0 : i64, tpu.core_type = #tpu.core_type<tc>, window_params = [{transform_indices = @transform_0, window_bounds = array<i64: 1, 64, 256>}, {pipeline_mode = #tpu.pipeline_mode<synchronous>, transform_indices = @transform_1, window_bounds = array<i64: 64, 8>}, {pipeline_mode = #tpu.pipeline_mode<synchronous>, transform_indices = @transform_2, window_bounds = array<i64: 1, 8>}, {pipeline_mode = #tpu.pipeline_mode<synchronous>, transform_indices = @transform_3, window_bounds = array<i64: 8, 64>}, {pipeline_mode = #tpu.pipeline_mode<synchronous>, transform_indices = @transform_4, window_bounds = array<i64: 1, 64>}, {transform_indices = @transform_5, window_bounds = array<i64: 1, 64, 256>}]} {
    %c0 = arith.constant 0 : index
    %c0_0 = arith.constant 0 : index
    %c0_1 = arith.constant 0 : index
    %0 = vector.load %arg1[%c0, %c0_0, %c0_1] : memref<1x64x256xf32, #tpu.memory_space<vmem>>, vector<1x64x256xf32>
    %cst = arith.constant dense<0.000000e+00> : vector<1x64xf32>
    %1 = vector.multi_reduction <add>, %0, %cst [2] : vector<1x64x256xf32> to vector<1x64xf32>
    %cst_2 = arith.constant 2.560000e+02 : f32
    %2 = vector.broadcast %cst_2 : f32 to vector<1x64xf32>
    %3 = arith.divf %1, %2 : vector<1x64xf32>
    %c0_3 = arith.constant 0 : index
    %c0_4 = arith.constant 0 : index
    %4 = vector.load %arg2[%c0_3, %c0_4] : memref<64x8xf32, #tpu.memory_space<vmem>>, vector<64x8xf32>
    %cst_5 = arith.constant dense<0.000000e+00> : vector<1x8xf32>
    %5 = tpu.matmul %3, %4, %cst_5 {dimension_numbers = #tpu.dot_dimension_numbers<[1], [0], [0], [1], [0, 0, 1, 1], [], []>} : vector<1x64xf32>, vector<64x8xf32>, vector<1x8xf32> -> vector<1x8xf32>
    %c0_6 = arith.constant 0 : index
    %c0_7 = arith.constant 0 : index
    %6 = vector.load %arg3[%c0_6, %c0_7] : memref<1x8xf32, #tpu.memory_space<vmem>>, vector<1x8xf32>
    %7 = arith.addf %5, %6 : vector<1x8xf32>
    %cst_8 = arith.constant 0.000000e+00 : f32
    %8 = vector.broadcast %cst_8 : f32 to vector<1x8xf32>
    %9 = arith.maximumf %7, %8 : vector<1x8xf32>
    %c0_9 = arith.constant 0 : index
    %c0_10 = arith.constant 0 : index
    %10 = vector.load %arg4[%c0_9, %c0_10] : memref<8x64xf32, #tpu.memory_space<vmem>>, vector<8x64xf32>
    %cst_11 = arith.constant dense<0.000000e+00> : vector<1x64xf32>
    %11 = tpu.matmul %9, %10, %cst_11 {dimension_numbers = #tpu.dot_dimension_numbers<[1], [0], [0], [1], [0, 0, 1, 1], [], []>} : vector<1x8xf32>, vector<8x64xf32>, vector<1x64xf32> -> vector<1x64xf32>
    %c0_12 = arith.constant 0 : index
    %c0_13 = arith.constant 0 : index
    %12 = vector.load %arg5[%c0_12, %c0_13] : memref<1x64xf32, #tpu.memory_space<vmem>>, vector<1x64xf32>
    %13 = arith.addf %11, %12 : vector<1x64xf32>
    %14 = arith.negf %13 : vector<1x64xf32>
    %15 = math.exp %14 : vector<1x64xf32>
    %cst_14 = arith.constant 1.000000e+00 : f32
    %16 = vector.broadcast %cst_14 : f32 to vector<1x64xf32>
    %17 = arith.addf %16, %15 : vector<1x64xf32>
    %18 = arith.divf %16, %17 : vector<1x64xf32>
    %19 = vector.shape_cast %18 : vector<1x64xf32> to vector<1x64x1xf32>
    %20 = vector.broadcast %19 : vector<1x64x1xf32> to vector<1x64x256xf32>
    %21 = arith.mulf %0, %20 : vector<1x64x256xf32>
    %c0_15 = arith.constant 0 : index
    %c0_16 = arith.constant 0 : index
    %c0_17 = arith.constant 0 : index
    %22 = vector.load %arg6[%c0_15, %c0_16, %c0_17] : memref<1x64x256xf32, #tpu.memory_space<vmem>>, vector<1x64x256xf32>
    tpu.vector_store %arg6[%c0_15, %c0_16, %c0_17], %21 {strides = array<i32>} : memref<1x64x256xf32, #tpu.memory_space<vmem>>, vector<1x64x256xf32>,
    return
  }
  func.func @transform_0(%arg0: i32) -> (i32, i32, i32) {
    %c0_i32 = arith.constant 0 : i32
    %c0_i32_0 = arith.constant 0 : i32
    %c0_i32_1 = arith.constant 0 : i32
    return %arg0, %c0_i32, %c0_i32_0 : i32, i32, i32
  }
  func.func @transform_1(%arg0: i32) -> (i32, i32) {
    %c0_i32 = arith.constant 0 : i32
    %c0_i32_0 = arith.constant 0 : i32
    %c0_i32_1 = arith.constant 0 : i32
    return %c0_i32, %c0_i32_0 : i32, i32
  }
  func.func @transform_2(%arg0: i32) -> (i32, i32) {
    %c0_i32 = arith.constant 0 : i32
    %c0_i32_0 = arith.constant 0 : i32
    %c0_i32_1 = arith.constant 0 : i32
    return %c0_i32, %c0_i32_0 : i32, i32
  }
  func.func @transform_3(%arg0: i32) -> (i32, i32) {
    %c0_i32 = arith.constant 0 : i32
    %c0_i32_0 = arith.constant 0 : i32
    %c0_i32_1 = arith.constant 0 : i32
    return %c0_i32, %c0_i32_0 : i32, i32
  }
  func.func @transform_4(%arg0: i32) -> (i32, i32) {
    %c0_i32 = arith.constant 0 : i32
    %c0_i32_0 = arith.constant 0 : i32
    %c0_i32_1 = arith.constant 0 : i32
    return %c0_i32, %c0_i32_0 : i32, i32
  }
  func.func @transform_5(%arg0: i32) -> (i32, i32, i32) {
    %c0_i32 = arith.constant 0 : i32
    %c0_i32_0 = arith.constant 0 : i32
    %c0_i32_1 = arith.constant 0 : i32
    return %arg0, %c0_i32, %c0_i32_0 : i32, i32, i32
  }
}

</mosaic_0001>

<llo_original>
// kernel: tpu_custom_call.1
$region0: #{tpu_custom_call.1}
  #allocation0 [shape = 'u32[]', space=smem, size = 0x4, offset = 0x4, fixed_abs, tag = 'smem constant byte address 0x4 - core index']
  #allocation1 [shape = 'u32[144,128]{1,0:T(1,128)}', space=vmem, size = 0x12000, scoped, tag = 'internal scratch']
  %s0 = inlined_call_operand.hbm [shape: f32[2,64,256], index: 0, kind: input, shape index: {}]
  %s1 = inlined_call_operand.vmem [shape: f32[64,8], index: 1, kind: input, shape index: {}]
  %s2 = inlined_call_operand.vmem [shape: f32[1,8], index: 2, kind: input, shape index: {}]
  %s3 = inlined_call_operand.vmem [shape: f32[8,64], index: 3, kind: input, shape index: {}]
  %s4 = inlined_call_operand.vmem [shape: f32[1,64], index: 4, kind: input, shape index: {}]
  %s5 = inlined_call_operand.hbm [shape: f32[2,64,256], index: 5, kind: output, shape index: {}]
  %s6 = sld [smem:[#allocation0]]
  $region57: #{tpu_custom_call.1} parent=0
    _
  %s8 = ssub.s32 1, %s6
  %s9 = scalar_select 0, %s8, %s6
  $region1: #{tpu_custom_call.1} parent=0
    #allocation2 [shape = 'u8[131072]{0}', space=vmem, size = 0x20000, scoped, tag = 'input window, operand 0']
    #allocation3 [shape = 's32[2]{0}', space=sflag, size = 0x8, scoped, tag = 'scoped memory for tpu_custom_call.1']
    #allocation4 [shape = 's32[2]{0}', space=sflag, size = 0x8, scoped, tag = 'scoped memory for tpu_custom_call.1']
    #allocation5 [shape = 'u8[131072]{0}', space=vmem, size = 0x20000, scoped, tag = 'output window, operand 0']
    %10 = vsyncpa [#allocation3], 0
    %s11 = scalar_lea.sflag [#allocation3], 1
    %12 = vsyncpa %s11, 0
    %13 = vsyncpa [#allocation4], 0
    %s14 = scalar_lea.sflag [#allocation4], 1
    %15 = vsyncpa %s14, 0
    loop: start=0, step=1, limit=4
    $region2: #{tpu_custom_call.1} parent=1 // loop_pre_header
      _
    $region3: #{tpu_custom_call.1} parent=1 // loop_header
      %s17 = sphi 0, %s21
      %p18 = scmp.ge.s32.totalorder %s17, 4
      %s27 = sphi 0, %s29
      %s30 = sphi 0, %s27
      %s31 = sphi 0, %s30
      %s47 = sphi 0, %s31
      %s51 = sphi 0, %s51
      %s53 = sphi 0, %s51
      %s54 = sphi 0, %s53
      %s68 = sphi 0, %s54
      %s72 = sphi 0, %s72
      %s74 = sphi 0, %s72
      %s75 = sphi 0, %s74
      %s89 = sphi 0, %s75
      %s93 = sphi 0, %s93
      %s95 = sphi 0, %s93
      %s96 = sphi 0, %s95
      %s110 = sphi 0, %s96
      %s114 = sphi 0, %s114
      %s116 = sphi 0, %s114
      %s117 = sphi 0, %s116
      %s131 = sphi 0, %s117
      %s137 = sphi 0, %s139
      %s140 = sphi 0, %s137
      %s141 = sphi 0, %s140
      %s157 = sphi 0, %s141
    $region4: #{tpu_custom_call.1} parent=1 // loop_header_branch
      %20 = sbr.rel (%p18) target = $region8
    $region5: #{tpu_custom_call.1} parent=1 // loop_body
      %s22 = ssub.s32 %s17, 1
      %s23 = ssub.s32 %s17, 2
      %s24 = sadd.s32 %s17, 1
      %s25 = ssub.s32 %s17, %s24
      %p26 = scmp.eq.s32.totalorder %s25, 0
      %s28 = sadd.s32 %s27, 1
      %s29 = scalar_select %p26, %s27, %s28
      %p32 = pneg %p26
      %p33 = scmp.eq.s32.totalorder %s17, 1
      %p34 = por %p32, %p33
      %p35 = scmp.ne.s32.totalorder %s27, %s30
      %p36 = scmp.eq.s32.totalorder %s17, 0
      %p37 = por %p35, %p36
      %p38 = scmp.ne.s32.totalorder %s27, %s30
      %p39 = scmp.eq.s32.totalorder %s22, 1
      %p40 = por %p38, %p39
      %p41 = scmp.ne.s32.totalorder %s30, %s31
      %p42 = scmp.eq.s32.totalorder %s22, 0
      %p43 = por %p41, %p42
      %p44 = scmp.ne.s32.totalorder %s30, %s31
      %p45 = scmp.eq.s32.totalorder %s23, 1
      %p46 = por %p44, %p45
      %p48 = scmp.ne.s32.totalorder %s31, %s47
      %p49 = scmp.eq.s32.totalorder %s23, 0
      %p50 = por %p48, %p49
      %s52 = sadd.s32 %s51, 1
      %p55 = scmp.eq.s32.totalorder %s17, 1
      %p56 = scmp.ne.s32.totalorder %s51, %s53
      %p57 = scmp.eq.s32.totalorder %s17, 0
      %p58 = por %p56, %p57
      %p59 = scmp.ne.s32.totalorder %s51, %s53
      %p60 = scmp.eq.s32.totalorder %s22, 1
      %p61 = por %p59, %p60
      %p62 = scmp.ne.s32.totalorder %s53, %s54
      %p63 = scmp.eq.s32.totalorder %s22, 0
      %p64 = por %p62, %p63
      %p65 = scmp.ne.s32.totalorder %s53, %s54
      %p66 = scmp.eq.s32.totalorder %s23, 1
      %p67 = por %p65, %p66
      %p69 = scmp.ne.s32.totalorder %s54, %s68
      %p70 = scmp.eq.s32.totalorder %s23, 0
      %p71 = por %p69, %p70
      %s73 = sadd.s32 %s72, 1
      %p76 = scmp.eq.s32.totalorder %s17, 1
      %p77 = scmp.ne.s32.totalorder %s72, %s74
      %p78 = scmp.eq.s32.totalorder %s17, 0
      %p79 = por %p77, %p78
      %p80 = scmp.ne.s32.totalorder %s72, %s74
      %p81 = scmp.eq.s32.totalorder %s22, 1
      %p82 = por %p80, %p81
      %p83 = scmp.ne.s32.totalorder %s74, %s75
      %p84 = scmp.eq.s32.totalorder %s22, 0
      %p85 = por %p83, %p84
      %p86 = scmp.ne.s32.totalorder %s74, %s75
      %p87 = scmp.eq.s32.totalorder %s23, 1
      %p88 = por %p86, %p87
      %p90 = scmp.ne.s32.totalorder %s75, %s89
      %p91 = scmp.eq.s32.totalorder %s23, 0
      %p92 = por %p90, %p91
      %s94 = sadd.s32 %s93, 1
      %p97 = scmp.eq.s32.totalorder %s17, 1
      %p98 = scmp.ne.s32.totalorder %s93, %s95
      %p99 = scmp.eq.s32.totalorder %s17, 0
      %p100 = por %p98, %p99
      %p101 = scmp.ne.s32.totalorder %s93, %s95
      %p102 = scmp.eq.s32.totalorder %s22, 1
      %p103 = por %p101, %p102
      %p104 = scmp.ne.s32.totalorder %s95, %s96
      %p105 = scmp.eq.s32.totalorder %s22, 0
      %p106 = por %p104, %p105
      %p107 = scmp.ne.s32.totalorder %s95, %s96
      %p108 = scmp.eq.s32.totalorder %s23, 1
      %p109 = por %p107, %p108
      %p111 = scmp.ne.s32.totalorder %s96, %s110
      %p112 = scmp.eq.s32.totalorder %s23, 0
      %p113 = por %p111, %p112
      %s115 = sadd.s32 %s114, 1
      %p118 = scmp.eq.s32.totalorder %s17, 1
      %p119 = scmp.ne.s32.totalorder %s114, %s116
      %p120 = scmp.eq.s32.totalorder %s17, 0
      %p121 = por %p119, %p120
      %p122 = scmp.ne.s32.totalorder %s114, %s116
      %p123 = scmp.eq.s32.totalorder %s22, 1
      %p124 = por %p122, %p123
      %p125 = scmp.ne.s32.totalorder %s116, %s117
      %p126 = scmp.eq.s32.totalorder %s22, 0
      %p127 = por %p125, %p126
      %p128 = scmp.ne.s32.totalorder %s116, %s117
      %p129 = scmp.eq.s32.totalorder %s23, 1
      %p130 = por %p128, %p129
      %p132 = scmp.ne.s32.totalorder %s117, %s131
      %p133 = scmp.eq.s32.totalorder %s23, 0
      %p134 = por %p132, %p133
      %s135 = ssub.s32 %s17, %s24
      %p136 = scmp.eq.s32.totalorder %s135, 0
      %s138 = sadd.s32 %s137, 1
      %s139 = scalar_select %p136, %s137, %s138
      %p142 = pneg %p136
      %p143 = scmp.eq.s32.totalorder %s17, 1
      %p144 = por %p142, %p143
      %p145 = scmp.ne.s32.totalorder %s137, %s140
      %p146 = scmp.eq.s32.totalorder %s17, 0
      %p147 = por %p145, %p146
      %p148 = scmp.ne.s32.totalorder %s137, %s140
      %p149 = scmp.eq.s32.totalorder %s22, 1
      %p150 = por %p148, %p149
      %p151 = scmp.ne.s32.totalorder %s140, %s141
      %p152 = scmp.eq.s32.totalorder %s22, 0
      %p153 = por %p151, %p152
      %p154 = scmp.ne.s32.totalorder %s140, %s141
      %p155 = scmp.eq.s32.totalorder %s23, 1
      %p156 = por %p154, %p155
      %p158 = scmp.ne.s32.totalorder %s141, %s157
      %p159 = scmp.eq.s32.totalorder %s23, 0
      %p160 = por %p158, %p159
      %p161 = scmp.le.s32.totalorder 1, %s17
      %p162 = scmp.lt.s32.totalorder %s17, 3
      %p163 = pnand %p161, %p162
      %p164 = pneg %p163
      // Predicated region
      $region9: #{tpu_custom_call.1} parent=5 // pred_check
        _
      $region10: #{tpu_custom_call.1} parent=5 // pred_check_branch
        %166 = sbr.rel (%p163) target = $region12
      $region11: #{tpu_custom_call.1} parent=5 // pred_region
        %s167 = ssub.s32 %s17, 1
        // Predicated region
        $region13: #{tpu_custom_call.1} parent=11 // pred_check
          %p168 = pneg %p64
        $region14: #{tpu_custom_call.1} parent=11 // pred_check_branch
          %170 = sbr.rel (%p168) target = $region16
        $region15: #{tpu_custom_call.1} parent=11 // pred_region
          _
        $region16: #{tpu_custom_call.1} parent=11 // pred_fallthru
          _
        // Predicated region
        $region17: #{tpu_custom_call.1} parent=11 // pred_check
          %p171 = pneg %p85
        $region18: #{tpu_custom_call.1} parent=11 // pred_check_branch
          %173 = sbr.rel (%p171) target = $region20
        $region19: #{tpu_custom_call.1} parent=11 // pred_region
          _
        $region20: #{tpu_custom_call.1} parent=11 // pred_fallthru
          _
        // Predicated region
        $region21: #{tpu_custom_call.1} parent=11 // pred_check
          %p174 = pneg %p106
        $region22: #{tpu_custom_call.1} parent=11 // pred_check_branch
          %176 = sbr.rel (%p174) target = $region24
        $region23: #{tpu_custom_call.1} parent=11 // pred_region
          _
        $region24: #{tpu_custom_call.1} parent=11 // pred_fallthru
          _
        // Predicated region
        $region25: #{tpu_custom_call.1} parent=11 // pred_check
          %p177 = pneg %p127
        $region26: #{tpu_custom_call.1} parent=11 // pred_check_branch
          %179 = sbr.rel (%p177) target = $region28
        $region27: #{tpu_custom_call.1} parent=11 // pred_region
          _
        $region28: #{tpu_custom_call.1} parent=11 // pred_fallthru
          _
      $region12: #{tpu_custom_call.1} parent=5 // pred_fallthru
        _
      %p180 = scmp.lt.s32.totalorder %s17, 2
      // Predicated region
      $region29: #{tpu_custom_call.1} parent=5 // pred_check
        %p181 = pneg %p180
      $region30: #{tpu_custom_call.1} parent=5 // pred_check_branch
        %183 = sbr.rel (%p181) target = $region32
      $region31: #{tpu_custom_call.1} parent=5 // pred_region
        // Predicated region
        $region33: #{tpu_custom_call.1} parent=31 // pred_check
          %p184 = pneg %p37
        $region34: #{tpu_custom_call.1} parent=31 // pred_check_branch
          %186 = sbr.rel (%p184) target = $region36
        $region35: #{tpu_custom_call.1} parent=31 // pred_region
          %s187 = sand.u32 %s27, 1
          %s188 = scalar_lea.sflag [#allocation3], %s187
          %s189 = sand.u32 %s27, 1
          %s190 = smul.addr %s189, 128
          %s191 = scalar_lea.vmem [#allocation2], %s190
          %s193 = ssub.s32 2048, 2048
          %194 = vsyncadd %s188, %s193
          %s195 = smul.addr %s17, 16
          %s196 = smul.addr %s195, 128
          %s197 = scalar_lea.hbm %s0, %s196
          %s198 = sshll.u32 %s191, 4
          %s199 = int_to_ptr.vmem [resolvable:$true] %s198
          %204 = dma.hbm_to_vmem [thread:$0]  %s197, 2048, %s199, %s188, 256, 256, 16
        $region36: #{tpu_custom_call.1} parent=31 // pred_fallthru
          _
      $region32: #{tpu_custom_call.1} parent=5 // pred_fallthru
        _
      %p205 = scmp.le.s32.totalorder 1, %s17
      %p206 = scmp.lt.s32.totalorder %s17, 3
      %p207 = pnand %p205, %p206
      %p208 = pneg %p207
      // Predicated region
      $region37: #{tpu_custom_call.1} parent=5 // pred_check
        _
      $region38: #{tpu_custom_call.1} parent=5 // pred_check_branch
        %210 = sbr.rel (%p207) target = $region40
      $region39: #{tpu_custom_call.1} parent=5 // pred_region
        %s211 = ssub.s32 %s17, 1
        %s212 = sand.u32 %s30, 1
        %s213 = scalar_lea.sflag [#allocation3], %s212
        %s214 = sand.u32 %s30, 1
        %s215 = smul.addr %s214, 128
        %s216 = scalar_lea.vmem [#allocation2], %s215
        // Predicated region
        $region41: #{tpu_custom_call.1} parent=39 // pred_check
          %p217 = pneg %p43
        $region42: #{tpu_custom_call.1} parent=39 // pred_check_branch
          %219 = sbr.rel (%p217) target = $region44
        $region43: #{tpu_custom_call.1} parent=39 // pred_region
          %220 = dma.done %s213, 2048
        $region44: #{tpu_custom_call.1} parent=39 // pred_fallthru
          _
        %s221 = sand.u32 %s30, 1
        %s222 = scalar_lea.sflag [#allocation3], %s221
        %s223 = sand.u32 %s30, 1
        %s224 = smul.addr %s223, 128
        %s225 = scalar_lea.vmem [#allocation2], %s224
        %p226 = pneg %p43
        %p227 = pneg %p40
        %p228 = pneg %p64
        %p229 = pneg %p61
        %p230 = pneg %p85
        %p231 = pneg %p82
        %p232 = pneg %p106
        %p233 = pneg %p103
        %p234 = pneg %p127
        %p235 = pneg %p124
        %p236 = pneg %p153
        %p237 = pneg %p150
        %s238 = sand.u32 %s140, 1
        %s239 = scalar_lea.sflag [#allocation4], %s238
        %s240 = sand.u32 %s140, 1
        %s241 = smul.addr %s240, 128
        %s242 = scalar_lea.vmem [#allocation5], %s241
        %v243 = vld [vmem:[%s216] sm:$0xff]
        %v244 = vld [vmem:[%s216 + $0x8] sm:$0xff]
        %v245 = vld [vmem:[%s216 + $0x10] sm:$0xff]
        %v246 = vld [vmem:[%s216 + $0x18] sm:$0xff]
        %v247 = vld [vmem:[%s216 + $0x20] sm:$0xff]
        %v248 = vld [vmem:[%s216 + $0x28] sm:$0xff]
        %v249 = vld [vmem:[%s216 + $0x30] sm:$0xff]
        %v250 = vld [vmem:[%s216 + $0x38] sm:$0xff]
        %v251 = vld [vmem:[%s216 + $0x40] sm:$0xff]
        %v252 = vld [vmem:[%s216 + $0x48] sm:$0xff]
        %v253 = vld [vmem:[%s216 + $0x50] sm:$0xff]
        %v254 = vld [vmem:[%s216 + $0x58] sm:$0xff]
        %v255 = vld [vmem:[%s216 + $0x60] sm:$0xff]
        %v256 = vld [vmem:[%s216 + $0x68] sm:$0xff]
        %v257 = vld [vmem:[%s216 + $0x70] sm:$0xff]
        %v258 = vld [vmem:[%s216 + $0x78] sm:$0xff]
        %v259 = vadd.f32 %v243, %v244
        %260 = vadd.xlane.f32.xlu0 %v259
        %v261 = vpop.xlane.xlu0 %260
        %v262 = vadd.f32 %v245, %v246
        %263 = vadd.xlane.f32.xlu0 %v262
        %v264 = vpop.xlane.xlu0 %263
        %v265 = vadd.f32 %v247, %v248
        %266 = vadd.xlane.f32.xlu0 %v265
        %v267 = vpop.xlane.xlu0 %266
        %v268 = vadd.f32 %v249, %v250
        %269 = vadd.xlane.f32.xlu0 %v268
        %v270 = vpop.xlane.xlu0 %269
        %v271 = vadd.f32 %v251, %v252
        %272 = vadd.xlane.f32.xlu0 %v271
        %v273 = vpop.xlane.xlu0 %272
        %v274 = vadd.f32 %v253, %v254
        %275 = vadd.xlane.f32.xlu0 %v274
        %v276 = vpop.xlane.xlu0 %275
        %v277 = vadd.f32 %v255, %v256
        %278 = vadd.xlane.f32.xlu0 %v277
        %v279 = vpop.xlane.xlu0 %278
        %v280 = vadd.f32 %v257, %v258
        %281 = vadd.xlane.f32.xlu0 %v280
        %v282 = vpop.xlane.xlu0 %281
        %v283 = vrcp.pop 256.0
        %v284 = vmul.f32 %v261, %v283
        %v285 = vmul.f32 %v264, %v283
        %v286 = vmul.f32 %v267, %v283
        %v287 = vmul.f32 %v270, %v283
        %v288 = vmul.f32 %v273, %v283
        %v289 = vmul.f32 %v276, %v283
        %v290 = vmul.f32 %v279, %v283
        %v291 = vmul.f32 %v282, %v283
        %v292 = vld [vmem:[%s1] sm:$0xff]
        %v293 = vld [vmem:[%s1 + $0x8] sm:$0xff]
        %v294 = vld [vmem:[%s1 + $0x10] sm:$0xff]
        %v295 = vld [vmem:[%s1 + $0x18] sm:$0xff]
        %v296 = vld [vmem:[%s1 + $0x20] sm:$0xff]
        %v297 = vld [vmem:[%s1 + $0x28] sm:$0xff]
        %v298 = vld [vmem:[%s1 + $0x30] sm:$0xff]
        %v299 = vld [vmem:[%s1 + $0x38] sm:$0xff]
        %v300 = vld [vmem:[%s2] sm:$0x1]
        %v309 = vlaneseq
        %v310 = vand.u32 %v309, 127
        %v311 = vlaneseq
        %v312 = vshrl.u32 %v311, 7
        %v313 = vsub.s32 %v310, %v312
        %v314 = vrot.slane %v284, %v313
        %v315 = vadd.s32 %v310, 4294967288
        %v316 = vlaneseq
        %v317 = vshrl.u32 %v316, 7
        %v318 = vsub.s32 %v315, %v317
        %v319 = vrot.slane %v285, %v318
        %vm320 = vcmask 130112
        %v321 = vsel %vm320, %v319, %v314
        %v322 = vadd.s32 %v310, 4294967280
        %v323 = vlaneseq
        %v324 = vshrl.u32 %v323, 7
        %v325 = vsub.s32 %v322, %v324
        %v326 = vrot.slane %v286, %v325
        %vm327 = vcmask 195712
        %v328 = vsel %vm327, %v326, %v321
        %v329 = vadd.s32 %v310, 4294967272
        %v330 = vlaneseq
        %v331 = vshrl.u32 %v330, 7
        %v332 = vsub.s32 %v329, %v331
        %v333 = vrot.slane %v287, %v332
        %vm334 = vcmask 261312
        %v335 = vsel %vm334, %v333, %v328
        %v336 = vadd.s32 %v310, 4294967264
        %v337 = vlaneseq
        %v338 = vshrl.u32 %v337, 7
        %v339 = vsub.s32 %v336, %v338
        %v340 = vrot.slane %v288, %v339
        %vm341 = vcmask 326912
        %v342 = vsel %vm341, %v340, %v335
        %v343 = vadd.s32 %v310, 4294967256
        %v344 = vlaneseq
        %v345 = vshrl.u32 %v344, 7
        %v346 = vsub.s32 %v343, %v345
        %v347 = vrot.slane %v289, %v346
        %vm348 = vcmask 392512
        %v349 = vsel %vm348, %v347, %v342
        %v350 = vadd.s32 %v310, 4294967248
        %v351 = vlaneseq
        %v352 = vshrl.u32 %v351, 7
        %v353 = vsub.s32 %v350, %v352
        %v354 = vrot.slane %v290, %v353
        %vm355 = vcmask 458112
        %v356 = vsel %vm355, %v354, %v349
        %v357 = vadd.s32 %v310, 4294967240
        %v358 = vlaneseq
        %v359 = vshrl.u32 %v358, 7
        %v360 = vsub.s32 %v357, %v359
        %v361 = vrot.slane %v291, %v360
        %vm362 = vcmask 523712
        %v363 = vsel %vm362, %v361, %v356
        %vm364 = vcmask 523264
        %v365 = vsel %vm364, %v363, 0
        %367 = vmatprep.subr.mxu0 0.0
        %368 = vmatpush1.msra.mxu0 %v292
        %369 = vmatprep.subr.mxu0 0.0
        %370 = vmatpush1.msra.mxu0 %v293
        %371 = vmatprep.subr.mxu0 0.0
        %372 = vmatpush1.msra.mxu0 %v294
        %373 = vmatprep.subr.mxu0 0.0
        %374 = vmatpush1.msra.mxu0 %v295
        %375 = vmatprep.subr.mxu0 0.0
        %376 = vmatpush1.msra.mxu0 %v296
        %377 = vmatprep.subr.mxu0 0.0
        %378 = vmatpush1.msra.mxu0 %v297
        %379 = vmatprep.subr.mxu0 0.0
        %380 = vmatpush1.msra.mxu0 %v298
        %381 = vmatprep.subr.mxu0 0.0
        %382 = vmatpush1.msra.mxu0 %v299
        %383 = vmatprep.subr.mxu0 0.0
        %384 = vmatpush1.msra.mxu0 0.0
        %385 = vmatprep.subr.mxu0 0.0
        %386 = vmatpush1.msra.mxu0 0.0
        %387 = vmatprep.subr.mxu0 0.0
        %388 = vmatpush1.msra.mxu0 0.0
        %389 = vmatprep.subr.mxu0 0.0
        %390 = vmatpush1.msra.mxu0 0.0
        %391 = vmatprep.subr.mxu0 0.0
        %392 = vmatpush1.msra.mxu0 0.0
        %393 = vmatprep.subr.mxu0 0.0
        %394 = vmatpush1.msra.mxu0 0.0
        %395 = vmatprep.subr.mxu0 0.0
        %396 = vmatpush1.msra.mxu0 0.0
        %397 = vmatprep.subr.mxu0 0.0
        %398 = vmatpush1.msra.mxu0 0.0
        %399 = vmatprep.subr.mxu0 0.0
        %400 = vmatpush1.msra.mxu0 0.0
        %401 = vmatprep.subr.mxu0 0.0
        %402 = vmatpush1.msra.mxu0 0.0
        %403 = vmatprep.subr.mxu0 0.0
        %404 = vmatpush1.msra.mxu0 0.0
        %405 = vmatprep.subr.mxu0 0.0
        %406 = vmatpush1.msra.mxu0 0.0
        %407 = vmatprep.subr.mxu0 0.0
        %408 = vmatpush1.msra.mxu0 0.0
        %409 = vmatprep.subr.mxu0 0.0
        %410 = vmatpush1.msra.mxu0 0.0
        %411 = vmatprep.subr.mxu0 0.0
        %412 = vmatpush1.msra.mxu0 0.0
        %413 = vmatprep.subr.mxu0 0.0
        %414 = vmatpush1.msra.mxu0 0.0
        %415 = vmatprep.subr.mxu0 0.0
        %416 = vmatpush1.msra.mxu0 0.0
        %417 = vmatprep.subr.mxu0 0.0
        %418 = vmatpush1.msra.mxu0 0.0
        %419 = vmatprep.subr.mxu0 0.0
        %420 = vmatpush1.msra.mxu0 0.0
        %421 = vmatprep.subr.mxu0 0.0
        %422 = vmatpush1.msra.mxu0 0.0
        %423 = vmatprep.subr.mxu0 0.0
        %424 = vmatpush1.msra.mxu0 0.0
        %425 = vmatprep.subr.mxu0 0.0
        %426 = vmatpush1.msra.mxu0 0.0
        %427 = vmatprep.subr.mxu0 0.0
        %428 = vmatpush1.msra.mxu0 0.0
        %429 = vmatprep.subr.mxu0 0.0
        %430 = vmatpush1.msra.mxu0 0.0
        %431 = vmatprep.mubr.f32.mxu0 0.0
        %432 = vmatmul.mubr.f32.gmra.mrb[0].mxu0 %v365
        %v433 = vpop.f32.mrb[0].mxu0
        %v434 = vadd.f32 %v300, %v433
        %v435 = vpop.f32.mrb[0].mxu0
        %436 = vdwg.mxu0
        %v437 = vmax.f32 %v434, 0.0
        %v438 = vld [vmem:[%s3] sm:$0xff]
        %v439 = vld [vmem:[%s4] sm:$0x1]
        %vm440 = vcmask 64512
        %v442 = vsel %vm440, %v437, 0
        %444 = vmatprep.subr.mxu0 0.0
        %445 = vmatpush1.msra.mxu0 %v438
        %446 = vmatprep.subr.mxu0 0.0
        %447 = vmatpush1.msra.mxu0 0.0
        %448 = vmatprep.subr.mxu0 0.0
        %449 = vmatpush1.msra.mxu0 0.0
        %450 = vmatprep.subr.mxu0 0.0
        %451 = vmatpush1.msra.mxu0 0.0
        %452 = vmatprep.subr.mxu0 0.0
        %453 = vmatpush1.msra.mxu0 0.0
        %454 = vmatprep.subr.mxu0 0.0
        %455 = vmatpush1.msra.mxu0 0.0
        %456 = vmatprep.subr.mxu0 0.0
        %457 = vmatpush1.msra.mxu0 0.0
        %458 = vmatprep.subr.mxu0 0.0
        %459 = vmatpush1.msra.mxu0 0.0
        %460 = vmatprep.subr.mxu0 0.0
        %461 = vmatpush1.msra.mxu0 0.0
        %462 = vmatprep.subr.mxu0 0.0
        %463 = vmatpush1.msra.mxu0 0.0
        %464 = vmatprep.subr.mxu0 0.0
        %465 = vmatpush1.msra.mxu0 0.0
        %466 = vmatprep.subr.mxu0 0.0
        %467 = vmatpush1.msra.mxu0 0.0
        %468 = vmatprep.subr.mxu0 0.0
        %469 = vmatpush1.msra.mxu0 0.0
        %470 = vmatprep.subr.mxu0 0.0
        %471 = vmatpush1.msra.mxu0 0.0
        %472 = vmatprep.subr.mxu0 0.0
        %473 = vmatpush1.msra.mxu0 0.0
        %474 = vmatprep.subr.mxu0 0.0
        %475 = vmatpush1.msra.mxu0 0.0
        %476 = vmatprep.subr.mxu0 0.0
        %477 = vmatpush1.msra.mxu0 0.0
        %478 = vmatprep.subr.mxu0 0.0
        %479 = vmatpush1.msra.mxu0 0.0
        %480 = vmatprep.subr.mxu0 0.0
        %481 = vmatpush1.msra.mxu0 0.0
        %482 = vmatprep.subr.mxu0 0.0
        %483 = vmatpush1.msra.mxu0 0.0
        %484 = vmatprep.subr.mxu0 0.0
        %485 = vmatpush1.msra.mxu0 0.0
        %486 = vmatprep.subr.mxu0 0.0
        %487 = vmatpush1.msra.mxu0 0.0
        %488 = vmatprep.subr.mxu0 0.0
        %489 = vmatpush1.msra.mxu0 0.0
        %490 = vmatprep.subr.mxu0 0.0
        %491 = vmatpush1.msra.mxu0 0.0
        %492 = vmatprep.subr.mxu0 0.0
        %493 = vmatpush1.msra.mxu0 0.0
        %494 = vmatprep.subr.mxu0 0.0
        %495 = vmatpush1.msra.mxu0 0.0
        %496 = vmatprep.subr.mxu0 0.0
        %497 = vmatpush1.msra.mxu0 0.0
        %498 = vmatprep.subr.mxu0 0.0
        %499 = vmatpush1.msra.mxu0 0.0
        %500 = vmatprep.subr.mxu0 0.0
        %501 = vmatpush1.msra.mxu0 0.0
        %502 = vmatprep.subr.mxu0 0.0
        %503 = vmatpush1.msra.mxu0 0.0
        %504 = vmatprep.subr.mxu0 0.0
        %505 = vmatpush1.msra.mxu0 0.0
        %506 = vmatprep.subr.mxu0 0.0
        %507 = vmatpush1.msra.mxu0 0.0
        %508 = vmatprep.mubr.f32.mxu0 0.0
        %509 = vmatmul.mubr.f32.gmra.mrb[0].mxu0 %v442
        %v510 = vpop.f32.mrb[0].mxu0
        %v511 = vadd.f32 %v439, %v510
        %v512 = vpop.f32.mrb[0].mxu0
        %513 = vdwg.mxu0
        %v514 = vxor.u32 %v511, 2147483648
        %v515 = vmul.f32 %v514, 1.442695
        %v516 = vpow.pop %v515
        %v517 = vadd.f32 %v516, 1.0
        %v518 = vrcp.pop %v517
        %v519 = vmul.f32 1.0, %v518
        %v520 = vlaneseq
        %v521 = vshrl.u32 %v520, 7
        %v522 = vsub.s32 0, %v521
        %v523 = vrot.slane %v519, %v522
        %525 = vbcast.lane.b32.xlu0 %v523, 256
        %v526 = vpop.permute.xlu0 %525
        %s528 = sor.u32 256, 8
        %529 = vbcast.lane.b32.xlu0 %v523, %s528
        %v530 = vpop.permute.xlu0 %529
        %s532 = sor.u32 256, 16
        %533 = vbcast.lane.b32.xlu0 %v523, %s532
        %v534 = vpop.permute.xlu0 %533
        %s536 = sor.u32 256, 24
        %537 = vbcast.lane.b32.xlu0 %v523, %s536
        %v538 = vpop.permute.xlu0 %537
        %s540 = sor.u32 256, 32
        %541 = vbcast.lane.b32.xlu0 %v523, %s540
        %v542 = vpop.permute.xlu0 %541
        %s544 = sor.u32 256, 40
        %545 = vbcast.lane.b32.xlu0 %v523, %s544
        %v546 = vpop.permute.xlu0 %545
        %s548 = sor.u32 256, 48
        %549 = vbcast.lane.b32.xlu0 %v523, %s548
        %v550 = vpop.permute.xlu0 %549
        %s552 = sor.u32 256, 56
        %553 = vbcast.lane.b32.xlu0 %v523, %s552
        %v554 = vpop.permute.xlu0 %553
        %v555 = vmul.f32 %v243, %v526
        %v556 = vmul.f32 %v244, %v526
        %v557 = vmul.f32 %v245, %v530
        %v558 = vmul.f32 %v246, %v530
        %v559 = vmul.f32 %v247, %v534
        %v560 = vmul.f32 %v248, %v534
        %v561 = vmul.f32 %v249, %v538
        %v562 = vmul.f32 %v250, %v538
        %v563 = vmul.f32 %v251, %v542
        %v564 = vmul.f32 %v252, %v542
        %v565 = vmul.f32 %v253, %v546
        %v566 = vmul.f32 %v254, %v546
        %v567 = vmul.f32 %v255, %v550
        %v568 = vmul.f32 %v256, %v550
        %v569 = vmul.f32 %v257, %v554
        %v570 = vmul.f32 %v258, %v554
        %571 = vst [vmem:[%s242] sm:$0xff] %v555
        %572 = vst [vmem:[%s242 + $0x8] sm:$0xff] %v556
        %573 = vst [vmem:[%s242 + $0x10] sm:$0xff] %v557
        %574 = vst [vmem:[%s242 + $0x18] sm:$0xff] %v558
        %575 = vst [vmem:[%s242 + $0x20] sm:$0xff] %v559
        %576 = vst [vmem:[%s242 + $0x28] sm:$0xff] %v560
        %577 = vst [vmem:[%s242 + $0x30] sm:$0xff] %v561
        %578 = vst [vmem:[%s242 + $0x38] sm:$0xff] %v562
        %579 = vst [vmem:[%s242 + $0x40] sm:$0xff] %v563
        %580 = vst [vmem:[%s242 + $0x48] sm:$0xff] %v564
        %581 = vst [vmem:[%s242 + $0x50] sm:$0xff] %v565
        %582 = vst [vmem:[%s242 + $0x58] sm:$0xff] %v566
        %583 = vst [vmem:[%s242 + $0x60] sm:$0xff] %v567
        %584 = vst [vmem:[%s242 + $0x68] sm:$0xff] %v568
        %585 = vst [vmem:[%s242 + $0x70] sm:$0xff] %v569
        %586 = vst [vmem:[%s242 + $0x78] sm:$0xff] %v570
        %s587 = sand.u32 %s140, 1
        %s588 = scalar_lea.sflag [#allocation4], %s587
        %s589 = sand.u32 %s140, 1
        %s590 = smul.addr %s589, 128
        %s591 = scalar_lea.vmem [#allocation5], %s590
        // Predicated region
        $region45: #{tpu_custom_call.1} parent=39 // pred_check
          %p592 = pneg %p150
        $region46: #{tpu_custom_call.1} parent=39 // pred_check_branch
          %594 = sbr.rel (%p592) target = $region48
        $region47: #{tpu_custom_call.1} parent=39 // pred_region
          %s596 = ssub.s32 2048, 2048
          %597 = vsyncadd %s588, %s596
          %s598 = smul.addr %s22, 16
          %s599 = smul.addr %s598, 128
          %s600 = scalar_lea.hbm %s5, %s599
          %s601 = sshll.u32 %s591, 4
          %s602 = int_to_ptr.vmem [resolvable:$true] %s601
          %607 = dma.vmem_to_hbm [thread:$0]  %s602, 2048, %s600, %s588, 256, 256, 16
        $region48: #{tpu_custom_call.1} parent=39 // pred_fallthru
          _
      $region40: #{tpu_custom_call.1} parent=5 // pred_fallthru
        _
      %p608 = scmp.le.s32.totalorder 2, %s17
      // Predicated region
      $region49: #{tpu_custom_call.1} parent=5 // pred_check
        %p609 = pneg %p608
      $region50: #{tpu_custom_call.1} parent=5 // pred_check_branch
        %611 = sbr.rel (%p609) target = $region52
      $region51: #{tpu_custom_call.1} parent=5 // pred_region
        %s612 = ssub.s32 %s17, 2
        // Predicated region
        $region53: #{tpu_custom_call.1} parent=51 // pred_check
          %p613 = pneg %p156
        $region54: #{tpu_custom_call.1} parent=51 // pred_check_branch
          %615 = sbr.rel (%p613) target = $region56
        $region55: #{tpu_custom_call.1} parent=51 // pred_region
          %s616 = sand.u32 %s141, 1
          %s617 = scalar_lea.sflag [#allocation4], %s616
          %s618 = sand.u32 %s141, 1
          %s619 = smul.addr %s618, 128
          %s620 = scalar_lea.vmem [#allocation5], %s619
          %621 = dma.done %s617, 2048
        $region56: #{tpu_custom_call.1} parent=51 // pred_fallthru
          _
      $region52: #{tpu_custom_call.1} parent=5 // pred_fallthru
        _
    $region6: #{tpu_custom_call.1} parent=1 // loop_footer
      %s21 = sadd.s32 1, %s17
    $region7: #{tpu_custom_call.1} parent=1 // loop_footer_branch
      %16 = sbr.rel target = $region3
    $region8: #{tpu_custom_call.1} parent=1 // loop_exit
      _
    %622 = vsyncpa [#allocation3], 1
    %s623 = scalar_lea.sflag [#allocation3], 1
    %624 = vsyncpa %s623, 1
    %625 = vsyncpa [#allocation4], 1
    %s626 = scalar_lea.sflag [#allocation4], 1
    %627 = vsyncpa %s626, 1

</llo_original>
